<compile_context>
chip_gen: v5e
topology: v5e:2x2
jax: 0.10.0
libtpu: 0.0.40
codegen_flags: <defaults>
</compile_context>

<pallas_src>
import functools

import jax
import jax.numpy as jnp
from jax import lax
from jax.experimental import pallas as pl
from jax.experimental.pallas import tpu as pltpu


# ----------------------------------------------------------------------------
# Fused kernel: one MXU matmul -> per-channel batch stats -> normalize+affine -> ReLU
# ----------------------------------------------------------------------------
def _conv_bn_relu_kernel(p_ref, w_ref, g_ref, b_ref, o_ref, *, eps):
    # p_ref : (Cin*K*K, N*H*W)  im2col patches; lane index = n*H*W + h*W + w
    # w_ref : (Cout, Cin*K*K)   conv weight, contraction index = c*K*K + kh*K + kw
    # g_ref : (Cout, 1)         BN gamma
    # b_ref : (Cout, 1)         BN beta
    # o_ref : (Cout, N*H*W)     fused output (lane-dense, written exactly once)

    # Whole conv as a single lane-dense MXU matmul; result stays in vregs.
    y = jnp.dot(w_ref[...], p_ref[...], preferred_element_type=jnp.float32)

    # Training-mode BatchNorm2d: per-channel mean / biased variance over N*H*W,
    # which is exactly the lane axis here -> two cheap lane reductions.
    inv_cnt = 1.0 / float(y.shape[1])
    mean = jnp.sum(y, axis=1, keepdims=True) * inv_cnt          # (Cout, 1)
    d = y - mean
    var = jnp.sum(d * d, axis=1, keepdims=True) * inv_cnt       # (Cout, 1)

    scale = g_ref[...] * lax.rsqrt(var + eps)                   # (Cout, 1)
    # gamma*(y-mean)/sqrt(var+eps) + beta, fused with ReLU; single store pass.
    o_ref[...] = jnp.maximum(d * scale + b_ref[...], 0.0)


# ----------------------------------------------------------------------------
# Wrapper: NCHW in / NCHW out, like the PyTorch module
# ----------------------------------------------------------------------------
def conv2d_block_forward(x_nchw, weight_oikk, bias, gamma, beta, eps=1e-5):
    """Conv2d(padding='same') + BatchNorm2d(batch stats) + ReLU."""
    del bias  # exactly cancelled by training-mode BatchNorm mean subtraction
    N, Cin, H, W = x_nchw.shape
    Cout, Cin_w, K, K2 = weight_oikk.shape
    assert Cin_w == Cin and K == K2
    assert K % 2 == 1, "padding='same' implemented for odd kernel sizes only"
    pad = K // 2
    HW = H * W
    CKK = Cin * K * K

    # im2col in one fused XLA pass (tiny data):
    #   patches[c*K*K + kh*K + kw, n*HW + h*W + w] = x[n, c, h+kh-pad, w+kw-pad] (0-pad)
    xp = jnp.pad(x_nchw, ((0, 0), (0, 0), (pad, pad), (pad, pad)))
    cols = [xp[:, :, kh:kh + H, kw:kw + W] for kh in range(K) for kw in range(K)]
    patches = jnp.stack(cols, axis=2).reshape(N, CKK, HW)          # (N, CKK, HW)
    patches = jnp.transpose(patches, (1, 0, 2)).reshape(CKK, N * HW)
    patches = patches.astype(jnp.float32)

    # PyTorch weight (Cout, Cin, K, K) flattens to the same c-major/(kh,kw)-minor order
    w2d = weight_oikk.reshape(Cout, CKK).astype(jnp.float32)
    g2d = gamma.reshape(Cout, 1).astype(jnp.float32)
    b2d = beta.reshape(Cout, 1).astype(jnp.float32)

    kernel = functools.partial(_conv_bn_relu_kernel, eps=eps)
    out2d = pl.pallas_call(
        kernel,
        out_shape=jax.ShapeDtypeStruct((Cout, N * HW), jnp.float32),
        grid_spec=pltpu.PrefetchScalarGridSpec(
            num_scalar_prefetch=0,
            grid=(1,),  # single invocation: whole problem fits comfortably in VMEM
            in_specs=[
                pl.BlockSpec((CKK, N * HW), lambda i: (0, 0)),
                pl.BlockSpec((Cout, CKK), lambda i: (0, 0)),
                pl.BlockSpec((Cout, 1), lambda i: (0, 0)),
                pl.BlockSpec((Cout, 1), lambda i: (0, 0)),
            ],
            out_specs=pl.BlockSpec((Cout, N * HW), lambda i: (0, 0)),
        ),
        compiler_params=pltpu.CompilerParams(dimension_semantics=("arbitrary",)),
    )(patches, w2d, g2d, b2d)

    # (Cout, N*HW) -> (N, Cout, H, W); tiny wrapper-side transpose (16 KiB).
    return jnp.transpose(out2d.reshape(Cout, N, H, W), (1, 0, 2, 3))


# ----------------------------------------------------------------------------
# Pure-JAX reference (PyTorch semantics) for a correctness self-check
# ----------------------------------------------------------------------------
def _reference_forward(x, w, b, gamma, beta, eps=1e-5):
    y = lax.conv_general_dilated(
        x, w, window_strides=(1, 1), padding="SAME",
        dimension_numbers=("NCHW", "OIHW", "NCHW"))
    y = y + b.reshape(1, -1, 1, 1)
    mean = jnp.mean(y, axis=(0, 2, 3), keepdims=True)
    var = jnp.mean(jnp.square(y - mean), axis=(0, 2, 3), keepdims=True)
    z = (y - mean) * lax.rsqrt(var + eps) * gamma.reshape(1, -1, 1, 1) \
        + beta.reshape(1, -1, 1, 1)
    return jnp.maximum(z, 0.0)


if __name__ == "__main__":
    # Small shapes consistent with the module: batch=2, in_dim=4, out_dim=8, 16x16, 3x3.
    N, Cin, Hs, Ws = 2, 4, 16, 16
    Cout, K = 8, 3

    key = jax.random.PRNGKey(0)
    kx, kw, kb = jax.random.split(key, 3)

    x = jax.random.normal(kx, (N, Cin, Hs, Ws), dtype=jnp.float32)

    # Deterministic parameter init (shapes match nn.Conv2d / nn.BatchNorm2d defaults).
    fan_in = Cin * K * K
    bound = 1.0 / (fan_in ** 0.5)
    weight = jax.random.uniform(kw, (Cout, Cin, K, K), jnp.float32, -bound, bound)
    bias = jax.random.uniform(kb, (Cout,), jnp.float32, -bound, bound)
    gamma = jnp.ones((Cout,), jnp.float32)    # BatchNorm2d default weight
    beta = jnp.zeros((Cout,), jnp.float32)    # BatchNorm2d default bias

    out = conv2d_block_forward(x, weight, bias, gamma, beta)
    out = jax.block_until_ready(out)

    ref = _reference_forward(x, weight, bias, gamma, beta)

    assert out.shape == (N, Cout, Hs, Ws)
    assert bool(jnp.all(jnp.isfinite(out)))
    assert bool(jnp.all(out >= 0.0))                       # ReLU
    assert bool(jnp.allclose(out, ref, rtol=1e-4, atol=1e-4))
    print("KERNEL_OK")
</pallas_src>

<mosaic_0001>
module attributes {stable_mosaic.version = 11 : i64} {
  func.func @_conv_bn_relu_kernel(%arg0: i32, %arg1: memref<36x512xf32, #tpu.memory_space<vmem>>, %arg2: memref<8x36xf32, #tpu.memory_space<vmem>>, %arg3: memref<8x1xf32, #tpu.memory_space<vmem>>, %arg4: memref<8x1xf32, #tpu.memory_space<vmem>>, %arg5: memref<8x512xf32, #tpu.memory_space<vmem>>) attributes {dimension_semantics = [#tpu.dimension_semantics<arbitrary>], iteration_bounds = array<i64: 1>, scalar_prefetch = 0 : i64, scratch_operands = 0 : i64, tpu.core_type = #tpu.core_type<tc>, window_params = [{pipeline_mode = #tpu.pipeline_mode<synchronous>, transform_indices = @transform_0, window_bounds = array<i64: 36, 512>}, {pipeline_mode = #tpu.pipeline_mode<synchronous>, transform_indices = @transform_1, window_bounds = array<i64: 8, 36>}, {pipeline_mode = #tpu.pipeline_mode<synchronous>, transform_indices = @transform_2, window_bounds = array<i64: 8, 1>}, {pipeline_mode = #tpu.pipeline_mode<synchronous>, transform_indices = @transform_3, window_bounds = array<i64: 8, 1>}, {pipeline_mode = #tpu.pipeline_mode<synchronous>, transform_indices = @transform_4, window_bounds = array<i64: 8, 512>}]} {
    %c0 = arith.constant 0 : index
    %c0_0 = arith.constant 0 : index
    %0 = vector.load %arg2[%c0, %c0_0] : memref<8x36xf32, #tpu.memory_space<vmem>>, vector<8x36xf32>
    %c0_1 = arith.constant 0 : index
    %c0_2 = arith.constant 0 : index
    %1 = vector.load %arg1[%c0_1, %c0_2] : memref<36x512xf32, #tpu.memory_space<vmem>>, vector<36x512xf32>
    %cst = arith.constant dense<0.000000e+00> : vector<8x512xf32>
    %2 = tpu.matmul %0, %1, %cst {dimension_numbers = #tpu.dot_dimension_numbers<[1], [0], [0], [1], [0, 0, 1, 1], [], []>} : vector<8x36xf32>, vector<36x512xf32>, vector<8x512xf32> -> vector<8x512xf32>
    %cst_3 = arith.constant dense<0.000000e+00> : vector<8xf32>
    %3 = vector.multi_reduction <add>, %2, %cst_3 [1] : vector<8x512xf32> to vector<8xf32>
    %4 = vector.shape_cast %3 : vector<8xf32> to vector<8x1xf32>
    %cst_4 = arith.constant 0.001953125 : f32
    %5 = vector.broadcast %cst_4 : f32 to vector<8x1xf32>
    %6 = arith.mulf %4, %5 : vector<8x1xf32>
    %7 = vector.broadcast %6 : vector<8x1xf32> to vector<8x512xf32>
    %8 = arith.subf %2, %7 : vector<8x512xf32>
    %9 = arith.mulf %8, %8 : vector<8x512xf32>
    %cst_5 = arith.constant dense<0.000000e+00> : vector<8xf32>
    %10 = vector.multi_reduction <add>, %9, %cst_5 [1] : vector<8x512xf32> to vector<8xf32>
    %11 = vector.shape_cast %10 : vector<8xf32> to vector<8x1xf32>
    %cst_6 = arith.constant 0.001953125 : f32
    %12 = vector.broadcast %cst_6 : f32 to vector<8x1xf32>
    %13 = arith.mulf %11, %12 : vector<8x1xf32>
    %c0_7 = arith.constant 0 : index
    %c0_8 = arith.constant 0 : index
    %14 = vector.load %arg3[%c0_7, %c0_8] : memref<8x1xf32, #tpu.memory_space<vmem>>, vector<8x1xf32>
    %cst_9 = arith.constant 9.99999974E-6 : f32
    %15 = vector.broadcast %cst_9 : f32 to vector<8x1xf32>
    %16 = arith.addf %13, %15 : vector<8x1xf32>
    %17 = math.rsqrt %16 : vector<8x1xf32>
    %18 = arith.mulf %14, %17 : vector<8x1xf32>
    %19 = vector.broadcast %18 : vector<8x1xf32> to vector<8x512xf32>
    %20 = arith.mulf %8, %19 : vector<8x512xf32>
    %c0_10 = arith.constant 0 : index
    %c0_11 = arith.constant 0 : index
    %21 = vector.load %arg4[%c0_10, %c0_11] : memref<8x1xf32, #tpu.memory_space<vmem>>, vector<8x1xf32>
    %22 = vector.broadcast %21 : vector<8x1xf32> to vector<8x512xf32>
    %23 = arith.addf %20, %22 : vector<8x512xf32>
    %cst_12 = arith.constant 0.000000e+00 : f32
    %24 = vector.broadcast %cst_12 : f32 to vector<8x512xf32>
    %25 = arith.maximumf %23, %24 : vector<8x512xf32>
    %c0_13 = arith.constant 0 : index
    %c0_14 = arith.constant 0 : index
    %26 = vector.load %arg5[%c0_13, %c0_14] : memref<8x512xf32, #tpu.memory_space<vmem>>, vector<8x512xf32>
    tpu.vector_store %arg5[%c0_13, %c0_14], %25 {strides = array<i32>} : memref<8x512xf32, #tpu.memory_space<vmem>>, vector<8x512xf32>,
    return
  }
  func.func @transform_0(%arg0: i32) -> (i32, i32) {
    %c0_i32 = arith.constant 0 : i32
    %c0_i32_0 = arith.constant 0 : i32
    %c0_i32_1 = arith.constant 0 : i32
    return %c0_i32, %c0_i32_0 : i32, i32
  }
  func.func @transform_1(%arg0: i32) -> (i32, i32) {
    %c0_i32 = arith.constant 0 : i32
    %c0_i32_0 = arith.constant 0 : i32
    %c0_i32_1 = arith.constant 0 : i32
    return %c0_i32, %c0_i32_0 : i32, i32
  }
  func.func @transform_2(%arg0: i32) -> (i32, i32) {
    %c0_i32 = arith.constant 0 : i32
    %c0_i32_0 = arith.constant 0 : i32
    %c0_i32_1 = arith.constant 0 : i32
    return %c0_i32, %c0_i32_0 : i32, i32
  }
  func.func @transform_3(%arg0: i32) -> (i32, i32) {
    %c0_i32 = arith.constant 0 : i32
    %c0_i32_0 = arith.constant 0 : i32
    %c0_i32_1 = arith.constant 0 : i32
    return %c0_i32, %c0_i32_0 : i32, i32
  }
  func.func @transform_4(%arg0: i32) -> (i32, i32) {
    %c0_i32 = arith.constant 0 : i32
    %c0_i32_0 = arith.constant 0 : i32
    %c0_i32_1 = arith.constant 0 : i32
    return %c0_i32, %c0_i32_0 : i32, i32
  }
}

</mosaic_0001>

<llo_original>
// kernel: tpu_custom_call.1
$region0: #{tpu_custom_call.1}
  #allocation0 [shape = 'u32[]', space=smem, size = 0x4, offset = 0x4, fixed_abs, tag = 'smem constant byte address 0x4 - core index']
  #allocation1 [shape = 'u32[72,128]{1,0:T(1,128)}', space=vmem, size = 0x9000, scoped, tag = 'internal scratch']
  %s0 = inlined_call_operand.hbm [shape: f32[36,512], index: 0, kind: input, shape index: {}]
  %s1 = inlined_call_operand.vmem [shape: f32[8,36], index: 1, kind: input, shape index: {}]
  %s2 = inlined_call_operand.vmem [shape: f32[8,1], index: 2, kind: input, shape index: {}]
  %s3 = inlined_call_operand.vmem [shape: f32[8,1], index: 3, kind: input, shape index: {}]
  %s4 = inlined_call_operand.hbm [shape: f32[8,512], index: 4, kind: output, shape index: {}]
  %s5 = sld [smem:[#allocation0]]
  $region30: #{tpu_custom_call.1} parent=0
    _
  %s7 = ssub.s32 1, %s5
  %s8 = scalar_select 0, %s7, %s5
  $region1: #{tpu_custom_call.1} parent=0
    #allocation2 [shape = 'u8[81920]{0}', space=vmem, size = 0x14000, scoped, tag = 'input window, operand 0, single buffered']
    #allocation3 [shape = 's32[1]{0}', space=sflag, size = 0x4, scoped, tag = 'scoped memory for tpu_custom_call.1']
    #allocation4 [shape = 's32[1]{0}', space=sflag, size = 0x4, scoped, tag = 'scoped memory for tpu_custom_call.1']
    #allocation5 [shape = 'u8[16384]{0}', space=vmem, size = 0x4000, scoped, tag = 'output window, operand 0, single buffered']
    %9 = vsyncpa [#allocation3], 0
    %10 = vsyncpa [#allocation4], 0
    // Predicated region
    $region2: #{tpu_custom_call.1} parent=1 // pred_check
      _
    $region3: #{tpu_custom_call.1} parent=1 // pred_check_branch
      %12 = sbr.rel (0) target = $region5
    $region4: #{tpu_custom_call.1} parent=1 // pred_region
      %14 = vsyncadd [#allocation3], 0
      %s15 = sshll.u32 %s0, 4
      %s16 = int_to_ptr.hbm [resolvable:$true] %s15
      %s17 = sshll.u32 [#allocation2], 4
      %s18 = int_to_ptr.vmem [resolvable:$true] %s17
      %23 = dma.hbm_to_vmem [thread:$0]  %s16, 2560, %s18, [#allocation3], 512, 512, 32
    $region5: #{tpu_custom_call.1} parent=1 // pred_fallthru
      _
    // Predicated region
    $region6: #{tpu_custom_call.1} parent=1 // pred_check
      _
    $region7: #{tpu_custom_call.1} parent=1 // pred_check_branch
      %25 = sbr.rel (0) target = $region9
    $region8: #{tpu_custom_call.1} parent=1 // pred_region
      _
    $region9: #{tpu_custom_call.1} parent=1 // pred_fallthru
      _
    // Predicated region
    $region10: #{tpu_custom_call.1} parent=1 // pred_check
      _
    $region11: #{tpu_custom_call.1} parent=1 // pred_check_branch
      %27 = sbr.rel (0) target = $region13
    $region12: #{tpu_custom_call.1} parent=1 // pred_region
      _
    $region13: #{tpu_custom_call.1} parent=1 // pred_fallthru
      _
    // Predicated region
    $region14: #{tpu_custom_call.1} parent=1 // pred_check
      _
    $region15: #{tpu_custom_call.1} parent=1 // pred_check_branch
      %29 = sbr.rel (0) target = $region17
    $region16: #{tpu_custom_call.1} parent=1 // pred_region
      _
    $region17: #{tpu_custom_call.1} parent=1 // pred_fallthru
      _
    // Predicated region
    $region18: #{tpu_custom_call.1} parent=1 // pred_check
      _
    $region19: #{tpu_custom_call.1} parent=1 // pred_check_branch
      %31 = sbr.rel (0) target = $region21
    $region20: #{tpu_custom_call.1} parent=1 // pred_region
      %33 = dma.done [#allocation3], 2560
    $region21: #{tpu_custom_call.1} parent=1 // pred_fallthru
      _
    %v34 = vld [vmem:[%s1] sm:$0xff]
    %v35 = vld [vmem:[#allocation2] sm:$0xff]
    %v36 = vld [vmem:[#allocation2 + $0x8] sm:$0xff]
    %v37 = vld [vmem:[#allocation2 + $0x10] sm:$0xff]
    %v38 = vld [vmem:[#allocation2 + $0x18] sm:$0xff]
    %v39 = vld [vmem:[#allocation2 + $0x20] sm:$0xff]
    %v40 = vld [vmem:[#allocation2 + $0x28] sm:$0xff]
    %v41 = vld [vmem:[#allocation2 + $0x30] sm:$0xff]
    %v42 = vld [vmem:[#allocation2 + $0x38] sm:$0xff]
    %v43 = vld [vmem:[#allocation2 + $0x40] sm:$0xff]
    %v44 = vld [vmem:[#allocation2 + $0x48] sm:$0xff]
    %v45 = vld [vmem:[#allocation2 + $0x50] sm:$0xff]
    %v46 = vld [vmem:[#allocation2 + $0x58] sm:$0xff]
    %v47 = vld [vmem:[#allocation2 + $0x60] sm:$0xff]
    %v48 = vld [vmem:[#allocation2 + $0x68] sm:$0xff]
    %v49 = vld [vmem:[#allocation2 + $0x70] sm:$0xff]
    %v50 = vld [vmem:[#allocation2 + $0x78] sm:$0xff]
    %v51 = vld [vmem:[#allocation2 + $0x80] sm:$0xf]
    %v52 = vld [vmem:[#allocation2 + $0x88] sm:$0xf]
    %v53 = vld [vmem:[#allocation2 + $0x90] sm:$0xf]
    %v54 = vld [vmem:[#allocation2 + $0x98] sm:$0xf]
    %vm55 = vcmask 293888
    %v57 = vsel %vm55, %v34, 0
    %vm59 = vcmask 1043456
    %v61 = vsel %vm59, %v51, 0
    %v64 = vsel %vm59, %v52, 0
    %v67 = vsel %vm59, %v53, 0
    %v70 = vsel %vm59, %v54, 0
    %72 = vmatpush.msra.mxu0 0.0
    %73 = vmatpush.msra.mxu0 0.0
    %74 = vmatpush.msra.mxu0 0.0
    %75 = vmatpush.msra.mxu0 0.0
    %76 = vmatpush.msra.mxu0 0.0
    %77 = vmatpush.msra.mxu0 0.0
    %78 = vmatpush.msra.mxu0 0.0
    %79 = vmatpush.msra.mxu0 0.0
    %80 = vmatpush.msra.mxu0 0.0
    %81 = vmatpush.msra.mxu0 0.0
    %82 = vmatpush.msra.mxu0 0.0
    %83 = vmatpush.msra.mxu0 %v61
    %84 = vmatpush.msra.mxu0 %v47
    %85 = vmatpush.msra.mxu0 %v43
    %86 = vmatpush.msra.mxu0 %v39
    %87 = vmatpush.msra.mxu0 %v35
    %88 = vmatmul.f32.gmra.mxu0 %v57
    %v89 = vpop.f32.mrf.mxu0
    %v90 = vadd.f32 0.0, %v89
    %91 = vdwg.mxu0
    %92 = vmatpush.msra.mxu0 0.0
    %93 = vmatpush.msra.mxu0 0.0
    %94 = vmatpush.msra.mxu0 0.0
    %95 = vmatpush.msra.mxu0 0.0
    %96 = vmatpush.msra.mxu0 0.0
    %97 = vmatpush.msra.mxu0 0.0
    %98 = vmatpush.msra.mxu0 0.0
    %99 = vmatpush.msra.mxu0 0.0
    %100 = vmatpush.msra.mxu0 0.0
    %101 = vmatpush.msra.mxu0 0.0
    %102 = vmatpush.msra.mxu0 0.0
    %103 = vmatpush.msra.mxu0 %v64
    %104 = vmatpush.msra.mxu0 %v48
    %105 = vmatpush.msra.mxu0 %v44
    %106 = vmatpush.msra.mxu0 %v40
    %107 = vmatpush.msra.mxu0 %v36
    %108 = vmatmul.f32.gmra.mxu0 %v57
    %v109 = vpop.f32.mrf.mxu0
    %v110 = vadd.f32 0.0, %v109
    %111 = vdwg.mxu0
    %112 = vmatpush.msra.mxu0 0.0
    %113 = vmatpush.msra.mxu0 0.0
    %114 = vmatpush.msra.mxu0 0.0
    %115 = vmatpush.msra.mxu0 0.0
    %116 = vmatpush.msra.mxu0 0.0
    %117 = vmatpush.msra.mxu0 0.0
    %118 = vmatpush.msra.mxu0 0.0
    %119 = vmatpush.msra.mxu0 0.0
    %120 = vmatpush.msra.mxu0 0.0
    %121 = vmatpush.msra.mxu0 0.0
    %122 = vmatpush.msra.mxu0 0.0
    %123 = vmatpush.msra.mxu0 %v67
    %124 = vmatpush.msra.mxu0 %v49
    %125 = vmatpush.msra.mxu0 %v45
    %126 = vmatpush.msra.mxu0 %v41
    %127 = vmatpush.msra.mxu0 %v37
    %128 = vmatmul.f32.gmra.mxu0 %v57
    %v129 = vpop.f32.mrf.mxu0
    %v130 = vadd.f32 0.0, %v129
    %131 = vdwg.mxu0
    %132 = vmatpush.msra.mxu0 0.0
    %133 = vmatpush.msra.mxu0 0.0
    %134 = vmatpush.msra.mxu0 0.0
    %135 = vmatpush.msra.mxu0 0.0
    %136 = vmatpush.msra.mxu0 0.0
    %137 = vmatpush.msra.mxu0 0.0
    %138 = vmatpush.msra.mxu0 0.0
    %139 = vmatpush.msra.mxu0 0.0
    %140 = vmatpush.msra.mxu0 0.0
    %141 = vmatpush.msra.mxu0 0.0
    %142 = vmatpush.msra.mxu0 0.0
    %143 = vmatpush.msra.mxu0 %v70
    %144 = vmatpush.msra.mxu0 %v50
    %145 = vmatpush.msra.mxu0 %v46
    %146 = vmatpush.msra.mxu0 %v42
    %147 = vmatpush.msra.mxu0 %v38
    %148 = vmatmul.f32.gmra.mxu0 %v57
    %v149 = vpop.f32.mrf.mxu0
    %v150 = vadd.f32 0.0, %v149
    %151 = vdwg.mxu0
    %v152 = vadd.f32 %v90, %v110
    %v153 = vadd.f32 %v152, %v130
    %v154 = vadd.f32 %v153, %v150
    %155 = vadd.xlane.f32.xlu0 %v154
    %v156 = vpop.xlane.xlu0 %155
    %v157 = vmul.f32 %v156, 0.001953125
    %v158 = vsub.f32 %v90, %v157
    %v159 = vsub.f32 %v110, %v157
    %v160 = vsub.f32 %v130, %v157
    %v161 = vsub.f32 %v150, %v157
    %v162 = vmul.f32 %v158, %v158
    %v163 = vmul.f32 %v159, %v159
    %v164 = vmul.f32 %v160, %v160
    %v165 = vmul.f32 %v161, %v161
    %v166 = vadd.f32 %v162, %v163
    %v167 = vadd.f32 %v166, %v164
    %v168 = vadd.f32 %v167, %v165
    %169 = vadd.xlane.f32.xlu0 %v168
    %v170 = vpop.xlane.xlu0 %169
    %v171 = vmul.f32 %v170, 0.001953125
    %v172 = vld [vmem:[%s2] sm:$0xff]
    %v173 = vadd.f32 %v171, 1e-05
    %v174 = vrsqrt.pop %v173
    %v175 = vmul.f32 %v174, %v173
    %v176 = vmul.f32 %v175, %v174
    %v177 = vmul.f32 0.5, %v176
    %v178 = vsub.f32 1.5, %v177
    %v179 = vmul.f32 %v174, %v178
    %vm180 = vweird.f32 %v173
    %vm181 = vweird.f32 %v174
    %vm182 = vmor %vm180, %vm181
    %v183 = vsel %vm182, %v174, %v179
    %v184 = vmul.f32 %v172, %v183
    %186 = vset.pattern.permute.xlu0 0
    %187 = vperm.xlu0 %186, %v184
    %v188 = vpop.permute.xlu0 %187
    %v190 = vmul.f32 %v158, %v188
    %v191 = vmul.f32 %v159, %v188
    %v192 = vmul.f32 %v160, %v188
    %v193 = vmul.f32 %v161, %v188
    %v194 = vld [vmem:[%s3] sm:$0xff]
    %196 = vset.pattern.permute.xlu0 0
    %197 = vperm.xlu0 %196, %v194
    %v198 = vpop.permute.xlu0 %197
    %v200 = vadd.f32 %v190, %v198
    %v201 = vadd.f32 %v191, %v198
    %v202 = vadd.f32 %v192, %v198
    %v203 = vadd.f32 %v193, %v198
    %v204 = vmax.f32 %v200, 0.0
    %v205 = vmax.f32 %v201, 0.0
    %v206 = vmax.f32 %v202, 0.0
    %v207 = vmax.f32 %v203, 0.0
    %208 = vst [vmem:[#allocation5] sm:$0xff] %v204
    %209 = vst [vmem:[#allocation5 + $0x8] sm:$0xff] %v205
    %210 = vst [vmem:[#allocation5 + $0x10] sm:$0xff] %v206
    %211 = vst [vmem:[#allocation5 + $0x18] sm:$0xff] %v207
    // Predicated region
    $region22: #{tpu_custom_call.1} parent=1 // pred_check
      _
    $region23: #{tpu_custom_call.1} parent=1 // pred_check_branch
      %213 = sbr.rel (0) target = $region25
    $region24: #{tpu_custom_call.1} parent=1 // pred_region
      %215 = vsyncadd [#allocation4], 0
      %s217 = sshll.u32 [#allocation5], 4
      %s218 = int_to_ptr.vmem [resolvable:$true] %s217
      %s219 = sshll.u32 %s4, 4
      %s220 = int_to_ptr.hbm [resolvable:$true] %s219
      %222 = dma.vmem_to_hbm [thread:$0]  %s218, 512, %s220, [#allocation4]
    $region25: #{tpu_custom_call.1} parent=1 // pred_fallthru
      _
    // Predicated region
    $region26: #{tpu_custom_call.1} parent=1 // pred_check
      _
    $region27: #{tpu_custom_call.1} parent=1 // pred_check_branch
      %224 = sbr.rel (0) target = $region29
    $region28: #{tpu_custom_call.1} parent=1 // pred_region
      %226 = dma.done [#allocation4], 512
    $region29: #{tpu_custom_call.1} parent=1 // pred_fallthru
      _
    %227 = vsyncpa [#allocation3], 1
    %228 = vsyncpa [#allocation4], 1

</llo_original>
